<compile_context>
chip_gen: v6e
topology: v6e:2x2x1
jax: 0.10.0
libtpu: 0.0.40
codegen_flags: <defaults>
</compile_context>

<pallas_src>
import functools

import jax
import jax.numpy as jnp
from jax.experimental import pallas as pl
from jax.experimental.pallas import tpu as pltpu

HIDDEN = 128
NUM_HIDDEN_LAYERS = 2
LANE = 128


def _round_up(n, m):
    return ((n + m - 1) // m) * m


def _mlp_kernel(x_ref, w0_ref, b0_ref, w1_ref, b1_ref, w2_ref, b2_ref,
                w3_ref, b3_ref, o_ref):
    # All matmuls use bf16 operands (MXU peak rate on v5e/v6e/v7x) with f32
    # accumulation; bias-add + ReLU run on the f32 accumulator on the VPU.
    h = jnp.dot(x_ref[...], w0_ref[...],
                preferred_element_type=jnp.float32) + b0_ref[...]
    h = jnp.maximum(h, 0.0)
    h = jnp.dot(h.astype(jnp.bfloat16), w1_ref[...],
                preferred_element_type=jnp.float32) + b1_ref[...]
    h = jnp.maximum(h, 0.0)
    h = jnp.dot(h.astype(jnp.bfloat16), w2_ref[...],
                preferred_element_type=jnp.float32) + b2_ref[...]
    h = jnp.maximum(h, 0.0)
    y = jnp.dot(h.astype(jnp.bfloat16), w3_ref[...],
                preferred_element_type=jnp.float32) + b3_ref[...]
    # Final matmul runs on the 128-padded W3 (fills the MXU N dim); store only
    # the real output columns so HBM writeback is d_out wide, not 128.
    o_ref[...] = y[:, :o_ref.shape[-1]].astype(o_ref.dtype)


@functools.partial(jax.jit, static_argnames=("block_b",))
def vector_module_forward(x, params, *, block_b=2048):
    """x: (B, state_dim) float32. params: tuple of (W, b) per layer, f32,
    W stored as (in_features, out_features) so the kernel does y = x @ W + b."""
    B, d_in = x.shape
    (w0, b0), (w1, b1), (w2, b2), (w3, b3) = params
    d_out = w3.shape[1]

    # --- batch tile selection:
    #   * cap at the requested block_b (default 2048 -> per-step overhead
    #     amortized, MXU M dimension full),
    #   * keep it a multiple of 8 (sublane) and never larger than the batch,
    #   * when the batch has >=16 rows, force >=2 grid steps so v7x's second
    #     TensorCore gets work under dimension_semantics=("parallel",).
    b8 = _round_up(max(B, 1), 8)
    bb = max(8, min(block_b, b8))
    if b8 >= 16:
        bb = min(bb, _round_up(-(-b8 // 2), 8))
    B_pad = _round_up(B, bb)
    x_p = x if B_pad == B else jnp.pad(x, ((0, B_pad - B), (0, 0)))

    # --- pad the final layer to 128 columns so the last matmul fills the MXU
    # N dimension; the kernel slices the result back down before storing.
    d_out_pad = _round_up(d_out, LANE)
    if d_out_pad != d_out:
        w3 = jnp.pad(w3, ((0, 0), (0, d_out_pad - d_out)))
        b3 = jnp.pad(b3, ((0, 0), (0, d_out_pad - d_out)))

    # --- bf16 MXU operands (f32 accumulation happens inside the kernel).
    x_p = x_p.astype(jnp.bfloat16)
    w0b = w0.astype(jnp.bfloat16)
    w1b = w1.astype(jnp.bfloat16)
    w2b = w2.astype(jnp.bfloat16)
    w3b = w3.astype(jnp.bfloat16)

    grid = (B_pad // bb,)

    def row_map(i):
        return (i, 0)

    def rep_map(i):
        return (0, 0)

    # Weight/bias index_maps are constant -> DMA'd once, VMEM-resident across
    # all grid steps.
    in_specs = [
        pl.BlockSpec((bb, d_in), row_map),             # x tile (bf16)
        pl.BlockSpec((d_in, HIDDEN), rep_map),         # W0 (bf16)
        pl.BlockSpec((1, HIDDEN), rep_map),            # b0 (f32)
        pl.BlockSpec((HIDDEN, HIDDEN), rep_map),       # W1 (bf16)
        pl.BlockSpec((1, HIDDEN), rep_map),            # b1 (f32)
        pl.BlockSpec((HIDDEN, HIDDEN), rep_map),       # W2 (bf16)
        pl.BlockSpec((1, HIDDEN), rep_map),            # b2 (f32)
        pl.BlockSpec((HIDDEN, d_out_pad), rep_map),    # W3 padded (bf16)
        pl.BlockSpec((1, d_out_pad), rep_map),         # b3 padded (f32)
    ]
    # Output block last dim == full array last dim (d_out), so the narrow
    # block shape is legal; writeback is d_out f32 columns per row.
    out_spec = pl.BlockSpec((bb, d_out), row_map)

    flops = 2 * B_pad * (d_in * HIDDEN
                         + HIDDEN * HIDDEN * NUM_HIDDEN_LAYERS
                         + HIDDEN * d_out_pad)
    bytes_accessed = (x_p.size * 2
                      + (w0b.size + w1b.size + w2b.size + w3b.size) * 2
                      + (b0.size + b1.size + b2.size + b3.size) * 4
                      + B_pad * d_out * 4)

    out = pl.pallas_call(
        _mlp_kernel,
        out_shape=jax.ShapeDtypeStruct((B_pad, d_out), jnp.float32),
        grid_spec=pltpu.PrefetchScalarGridSpec(
            num_scalar_prefetch=0,
            grid=grid,
            in_specs=in_specs,
            out_specs=out_spec,
        ),
        compiler_params=pltpu.CompilerParams(
            dimension_semantics=("parallel",)),
        cost_estimate=pl.CostEstimate(
            flops=flops, transcendentals=0, bytes_accessed=bytes_accessed),
    )(x_p, w0b, b0, w1b, b1, w2b, b2, w3b, b3)

    return out[:B] if B_pad != B else out


def init_params(key, state_dim, output_dim):
    """Deterministic synthetic f32 parameters matching FCBlock(128, 2, in, out)."""
    dims = [(state_dim, HIDDEN)]
    dims += [(HIDDEN, HIDDEN)] * NUM_HIDDEN_LAYERS
    dims += [(HIDDEN, output_dim)]
    params = []
    for (fan_in, fan_out) in dims:
        key, kw, kb = jax.random.split(key, 3)
        bound = 1.0 / jnp.sqrt(fan_in)
        # stored as (in, out) so kernel does x @ W
        w = jax.random.uniform(kw, (fan_in, fan_out), jnp.float32,
                               minval=-bound, maxval=bound)
        b = jax.random.uniform(kb, (1, fan_out), jnp.float32,
                               minval=-bound, maxval=bound)
        params.append((w, b))
    return tuple(params)


def reference_forward_f32(x, params):
    h = x
    for i, (w, b) in enumerate(params):
        h = h @ w + b
        if i < len(params) - 1:
            h = jnp.maximum(h, 0.0)
    return h


def reference_forward_bf16(x, params):
    # Mirrors the kernel's mixed precision: bf16 matmul operands, f32 accum.
    h = x
    for i, (w, b) in enumerate(params):
        h = jnp.dot(h.astype(jnp.bfloat16), w.astype(jnp.bfloat16),
                    preferred_element_type=jnp.float32) + b
        if i < len(params) - 1:
            h = jnp.maximum(h, 0.0)
    return h


if __name__ == "__main__":
    state_dim = 16
    output_dim = 8
    batch = 200   # ragged on purpose: exercises batch padding + 2 grid steps

    key = jax.random.PRNGKey(0)
    kx, kp = jax.random.split(key)
    x = jax.random.normal(kx, (batch, state_dim), jnp.float32)
    params = init_params(kp, state_dim, output_dim)

    out = vector_module_forward(x, params)   # default block_b, auto-clamped
    out = jax.block_until_ready(out)

    ref_bf = reference_forward_bf16(x, params)
    ref_32 = reference_forward_f32(x, params)

    assert out.shape == (batch, output_dim)
    assert out.dtype == jnp.float32
    # Matches a same-precision (bf16-in / f32-acc) reference tightly ...
    assert jnp.allclose(out, ref_bf, atol=1e-3, rtol=1e-3), \
        float(jnp.max(jnp.abs(out - ref_bf)))
    # ... and the full-f32 PyTorch-equivalent reference within bf16 tolerance.
    assert jnp.allclose(out, ref_32, atol=5e-2, rtol=5e-2), \
        float(jnp.max(jnp.abs(out - ref_32)))

    print("KERNEL_OK")
</pallas_src>

<mosaic_0001>
module attributes {stable_mosaic.version = 11 : i64} {
  func.func @_mlp_kernel(%arg0: i32, %arg1: memref<104x16xbf16, #tpu.memory_space<vmem>>, %arg2: memref<16x128xbf16, #tpu.memory_space<vmem>>, %arg3: memref<1x128xf32, #tpu.memory_space<vmem>>, %arg4: memref<128x128xbf16, #tpu.memory_space<vmem>>, %arg5: memref<1x128xf32, #tpu.memory_space<vmem>>, %arg6: memref<128x128xbf16, #tpu.memory_space<vmem>>, %arg7: memref<1x128xf32, #tpu.memory_space<vmem>>, %arg8: memref<128x128xbf16, #tpu.memory_space<vmem>>, %arg9: memref<1x128xf32, #tpu.memory_space<vmem>>, %arg10: memref<104x8xf32, #tpu.memory_space<vmem>>) attributes {dimension_semantics = [#tpu.dimension_semantics<parallel>], iteration_bounds = array<i64: 2>, scalar_prefetch = 0 : i64, scratch_operands = 0 : i64, tpu.core_type = #tpu.core_type<tc>, window_params = [{transform_indices = @transform_0, window_bounds = array<i64: 104, 16>}, {pipeline_mode = #tpu.pipeline_mode<synchronous>, transform_indices = @transform_1, window_bounds = array<i64: 16, 128>}, {pipeline_mode = #tpu.pipeline_mode<synchronous>, transform_indices = @transform_2, window_bounds = array<i64: 1, 128>}, {pipeline_mode = #tpu.pipeline_mode<synchronous>, transform_indices = @transform_3, window_bounds = array<i64: 128, 128>}, {pipeline_mode = #tpu.pipeline_mode<synchronous>, transform_indices = @transform_4, window_bounds = array<i64: 1, 128>}, {pipeline_mode = #tpu.pipeline_mode<synchronous>, transform_indices = @transform_5, window_bounds = array<i64: 128, 128>}, {pipeline_mode = #tpu.pipeline_mode<synchronous>, transform_indices = @transform_6, window_bounds = array<i64: 1, 128>}, {pipeline_mode = #tpu.pipeline_mode<synchronous>, transform_indices = @transform_7, window_bounds = array<i64: 128, 128>}, {pipeline_mode = #tpu.pipeline_mode<synchronous>, transform_indices = @transform_8, window_bounds = array<i64: 1, 128>}, {transform_indices = @transform_9, window_bounds = array<i64: 104, 8>}]} {
    %c0 = arith.constant 0 : index
    %c0_0 = arith.constant 0 : index
    %0 = vector.load %arg1[%c0, %c0_0] : memref<104x16xbf16, #tpu.memory_space<vmem>>, vector<104x16xbf16>
    %c0_1 = arith.constant 0 : index
    %c0_2 = arith.constant 0 : index
    %1 = vector.load %arg2[%c0_1, %c0_2] : memref<16x128xbf16, #tpu.memory_space<vmem>>, vector<16x128xbf16>
    %cst = arith.constant dense<0.000000e+00> : vector<104x128xf32>
    %2 = tpu.matmul %0, %1, %cst {dimension_numbers = #tpu.dot_dimension_numbers<[1], [0], [0], [1], [0, 0, 1, 1], [], []>} : vector<104x16xbf16>, vector<16x128xbf16>, vector<104x128xf32> -> vector<104x128xf32>
    %c0_3 = arith.constant 0 : index
    %c0_4 = arith.constant 0 : index
    %3 = vector.load %arg3[%c0_3, %c0_4] : memref<1x128xf32, #tpu.memory_space<vmem>>, vector<1x128xf32>
    %4 = vector.broadcast %3 : vector<1x128xf32> to vector<104x128xf32>
    %5 = arith.addf %2, %4 : vector<104x128xf32>
    %cst_5 = arith.constant 0.000000e+00 : f32
    %6 = vector.broadcast %cst_5 : f32 to vector<104x128xf32>
    %7 = arith.maximumf %5, %6 : vector<104x128xf32>
    %8 = arith.truncf %7 : vector<104x128xf32> to vector<104x128xbf16>
    %c0_6 = arith.constant 0 : index
    %c0_7 = arith.constant 0 : index
    %9 = vector.load %arg4[%c0_6, %c0_7] : memref<128x128xbf16, #tpu.memory_space<vmem>>, vector<128x128xbf16>
    %cst_8 = arith.constant dense<0.000000e+00> : vector<104x128xf32>
    %10 = tpu.matmul %8, %9, %cst_8 {dimension_numbers = #tpu.dot_dimension_numbers<[1], [0], [0], [1], [0, 0, 1, 1], [], []>} : vector<104x128xbf16>, vector<128x128xbf16>, vector<104x128xf32> -> vector<104x128xf32>
    %c0_9 = arith.constant 0 : index
    %c0_10 = arith.constant 0 : index
    %11 = vector.load %arg5[%c0_9, %c0_10] : memref<1x128xf32, #tpu.memory_space<vmem>>, vector<1x128xf32>
    %12 = vector.broadcast %11 : vector<1x128xf32> to vector<104x128xf32>
    %13 = arith.addf %10, %12 : vector<104x128xf32>
    %cst_11 = arith.constant 0.000000e+00 : f32
    %14 = vector.broadcast %cst_11 : f32 to vector<104x128xf32>
    %15 = arith.maximumf %13, %14 : vector<104x128xf32>
    %16 = arith.truncf %15 : vector<104x128xf32> to vector<104x128xbf16>
    %c0_12 = arith.constant 0 : index
    %c0_13 = arith.constant 0 : index
    %17 = vector.load %arg6[%c0_12, %c0_13] : memref<128x128xbf16, #tpu.memory_space<vmem>>, vector<128x128xbf16>
    %cst_14 = arith.constant dense<0.000000e+00> : vector<104x128xf32>
    %18 = tpu.matmul %16, %17, %cst_14 {dimension_numbers = #tpu.dot_dimension_numbers<[1], [0], [0], [1], [0, 0, 1, 1], [], []>} : vector<104x128xbf16>, vector<128x128xbf16>, vector<104x128xf32> -> vector<104x128xf32>
    %c0_15 = arith.constant 0 : index
    %c0_16 = arith.constant 0 : index
    %19 = vector.load %arg7[%c0_15, %c0_16] : memref<1x128xf32, #tpu.memory_space<vmem>>, vector<1x128xf32>
    %20 = vector.broadcast %19 : vector<1x128xf32> to vector<104x128xf32>
    %21 = arith.addf %18, %20 : vector<104x128xf32>
    %cst_17 = arith.constant 0.000000e+00 : f32
    %22 = vector.broadcast %cst_17 : f32 to vector<104x128xf32>
    %23 = arith.maximumf %21, %22 : vector<104x128xf32>
    %24 = arith.truncf %23 : vector<104x128xf32> to vector<104x128xbf16>
    %c0_18 = arith.constant 0 : index
    %c0_19 = arith.constant 0 : index
    %25 = vector.load %arg8[%c0_18, %c0_19] : memref<128x128xbf16, #tpu.memory_space<vmem>>, vector<128x128xbf16>
    %cst_20 = arith.constant dense<0.000000e+00> : vector<104x128xf32>
    %26 = tpu.matmul %24, %25, %cst_20 {dimension_numbers = #tpu.dot_dimension_numbers<[1], [0], [0], [1], [0, 0, 1, 1], [], []>} : vector<104x128xbf16>, vector<128x128xbf16>, vector<104x128xf32> -> vector<104x128xf32>
    %c0_21 = arith.constant 0 : index
    %c0_22 = arith.constant 0 : index
    %27 = vector.load %arg9[%c0_21, %c0_22] : memref<1x128xf32, #tpu.memory_space<vmem>>, vector<1x128xf32>
    %28 = vector.broadcast %27 : vector<1x128xf32> to vector<104x128xf32>
    %29 = arith.addf %26, %28 : vector<104x128xf32>
    %30 = vector.extract_strided_slice %29 {offsets = [0, 0], sizes = [104, 8], strides = [1, 1]} : vector<104x128xf32> to vector<104x8xf32>
    %c0_23 = arith.constant 0 : index
    %c0_24 = arith.constant 0 : index
    %31 = vector.load %arg10[%c0_23, %c0_24] : memref<104x8xf32, #tpu.memory_space<vmem>>, vector<104x8xf32>
    tpu.vector_store %arg10[%c0_23, %c0_24], %30 {strides = array<i32>} : memref<104x8xf32, #tpu.memory_space<vmem>>, vector<104x8xf32>,
    return
  }
  func.func @transform_0(%arg0: i32) -> (i32, i32) {
    %c0_i32 = arith.constant 0 : i32
    %c0_i32_0 = arith.constant 0 : i32
    return %arg0, %c0_i32 : i32, i32
  }
  func.func @transform_1(%arg0: i32) -> (i32, i32) {
    %c0_i32 = arith.constant 0 : i32
    %c0_i32_0 = arith.constant 0 : i32
    %c0_i32_1 = arith.constant 0 : i32
    return %c0_i32, %c0_i32_0 : i32, i32
  }
  func.func @transform_2(%arg0: i32) -> (i32, i32) {
    %c0_i32 = arith.constant 0 : i32
    %c0_i32_0 = arith.constant 0 : i32
    %c0_i32_1 = arith.constant 0 : i32
    return %c0_i32, %c0_i32_0 : i32, i32
  }
  func.func @transform_3(%arg0: i32) -> (i32, i32) {
    %c0_i32 = arith.constant 0 : i32
    %c0_i32_0 = arith.constant 0 : i32
    %c0_i32_1 = arith.constant 0 : i32
    return %c0_i32, %c0_i32_0 : i32, i32
  }
  func.func @transform_4(%arg0: i32) -> (i32, i32) {
    %c0_i32 = arith.constant 0 : i32
    %c0_i32_0 = arith.constant 0 : i32
    %c0_i32_1 = arith.constant 0 : i32
    return %c0_i32, %c0_i32_0 : i32, i32
  }
  func.func @transform_5(%arg0: i32) -> (i32, i32) {
    %c0_i32 = arith.constant 0 : i32
    %c0_i32_0 = arith.constant 0 : i32
    %c0_i32_1 = arith.constant 0 : i32
    return %c0_i32, %c0_i32_0 : i32, i32
  }
  func.func @transform_6(%arg0: i32) -> (i32, i32) {
    %c0_i32 = arith.constant 0 : i32
    %c0_i32_0 = arith.constant 0 : i32
    %c0_i32_1 = arith.constant 0 : i32
    return %c0_i32, %c0_i32_0 : i32, i32
  }
  func.func @transform_7(%arg0: i32) -> (i32, i32) {
    %c0_i32 = arith.constant 0 : i32
    %c0_i32_0 = arith.constant 0 : i32
    %c0_i32_1 = arith.constant 0 : i32
    return %c0_i32, %c0_i32_0 : i32, i32
  }
  func.func @transform_8(%arg0: i32) -> (i32, i32) {
    %c0_i32 = arith.constant 0 : i32
    %c0_i32_0 = arith.constant 0 : i32
    %c0_i32_1 = arith.constant 0 : i32
    return %c0_i32, %c0_i32_0 : i32, i32
  }
  func.func @transform_9(%arg0: i32) -> (i32, i32) {
    %c0_i32 = arith.constant 0 : i32
    %c0_i32_0 = arith.constant 0 : i32
    return %arg0, %c0_i32 : i32, i32
  }
}

</mosaic_0001>

<llo_original>
// kernel: vector_module_forward.1
$region0: #{vector_module_forward.1}
  #allocation0 [shape = 'u32[]', space=smem, size = 0x4, offset = 0x4, fixed_abs, tag = 'smem constant byte address 0x4 - core index']
  #allocation1 [shape = 'u32[144,128]{1,0:T(1,128)}', space=vmem, size = 0x12000, scoped, tag = 'internal scratch']
  %s0 = inlined_call_operand.vmem [shape: bf16[208,16], index: 0, kind: input, shape index: {}]
  %s1 = inlined_call_operand.vmem [shape: bf16[16,128], index: 1, kind: input, shape index: {}]
  %s2 = inlined_call_operand.vmem [shape: f32[1,128], index: 2, kind: input, shape index: {}]
  %s3 = inlined_call_operand.vmem [shape: bf16[128,128], index: 3, kind: input, shape index: {}]
  %s4 = inlined_call_operand.vmem [shape: f32[1,128], index: 4, kind: input, shape index: {}]
  %s5 = inlined_call_operand.vmem [shape: bf16[128,128], index: 5, kind: input, shape index: {}]
  %s6 = inlined_call_operand.vmem [shape: f32[1,128], index: 6, kind: input, shape index: {}]
  %s7 = inlined_call_operand.vmem [shape: bf16[128,128], index: 7, kind: input, shape index: {}]
  %s8 = inlined_call_operand.vmem [shape: f32[1,128], index: 8, kind: input, shape index: {}]
  %s9 = inlined_call_operand.vmem [shape: f32[208,8], index: 9, kind: output, shape index: {}]
  %s10 = sld [smem:[#allocation0]]
  $region69: #{vector_module_forward.1} parent=0
    _
  %s12 = ssub.s32 1, %s10
  %s13 = scalar_select 0, %s12, %s10
  loop: start=0, step=1, limit=4
  $region2: #{vector_module_forward.1} parent=0 // loop_pre_header
    _
  $region3: #{vector_module_forward.1} parent=0 // loop_header
    %s15 = sphi 0, %s19
    %p16 = scmp.ge.s32.totalorder %s15, 4
    %s25 = sphi 0, %s27
    %s28 = sphi 0, %s25
    %s29 = sphi 0, %s28
    %s45 = sphi 0, %s29
    %s49 = sphi 0, %s49
    %s51 = sphi 0, %s49
    %s52 = sphi 0, %s51
    %s66 = sphi 0, %s52
    %s70 = sphi 0, %s70
    %s72 = sphi 0, %s70
    %s73 = sphi 0, %s72
    %s87 = sphi 0, %s73
    %s91 = sphi 0, %s91
    %s93 = sphi 0, %s91
    %s94 = sphi 0, %s93
    %s108 = sphi 0, %s94
    %s112 = sphi 0, %s112
    %s114 = sphi 0, %s112
    %s115 = sphi 0, %s114
    %s129 = sphi 0, %s115
    %s133 = sphi 0, %s133
    %s135 = sphi 0, %s133
    %s136 = sphi 0, %s135
    %s150 = sphi 0, %s136
    %s154 = sphi 0, %s154
    %s156 = sphi 0, %s154
    %s157 = sphi 0, %s156
    %s171 = sphi 0, %s157
    %s175 = sphi 0, %s175
    %s177 = sphi 0, %s175
    %s178 = sphi 0, %s177
    %s192 = sphi 0, %s178
    %s196 = sphi 0, %s196
    %s198 = sphi 0, %s196
    %s199 = sphi 0, %s198
    %s213 = sphi 0, %s199
    %s219 = sphi 0, %s221
    %s222 = sphi 0, %s219
    %s223 = sphi 0, %s222
    %s239 = sphi 0, %s223
  $region4: #{vector_module_forward.1} parent=0 // loop_header_branch
    %18 = sbr.rel (%p16) target = $region8
  $region5: #{vector_module_forward.1} parent=0 // loop_body
    %s20 = ssub.s32 %s15, 1
    %s21 = ssub.s32 %s15, 2
    %s22 = sadd.s32 %s15, 1
    %s23 = ssub.s32 %s15, %s22
    %p24 = scmp.eq.s32.totalorder %s23, 0
    %s26 = sadd.s32 %s25, 1
    %s27 = scalar_select %p24, %s25, %s26
    %p30 = pneg %p24
    %p31 = scmp.eq.s32.totalorder %s15, 1
    %p32 = por %p30, %p31
    %p33 = scmp.ne.s32.totalorder %s25, %s28
    %p34 = scmp.eq.s32.totalorder %s15, 0
    %p35 = por %p33, %p34
    %p36 = scmp.ne.s32.totalorder %s25, %s28
    %p37 = scmp.eq.s32.totalorder %s20, 1
    %p38 = por %p36, %p37
    %p39 = scmp.ne.s32.totalorder %s28, %s29
    %p40 = scmp.eq.s32.totalorder %s20, 0
    %p41 = por %p39, %p40
    %p42 = scmp.ne.s32.totalorder %s28, %s29
    %p43 = scmp.eq.s32.totalorder %s21, 1
    %p44 = por %p42, %p43
    %p46 = scmp.ne.s32.totalorder %s29, %s45
    %p47 = scmp.eq.s32.totalorder %s21, 0
    %p48 = por %p46, %p47
    %s50 = sadd.s32 %s49, 1
    %p53 = scmp.eq.s32.totalorder %s15, 1
    %p54 = scmp.ne.s32.totalorder %s49, %s51
    %p55 = scmp.eq.s32.totalorder %s15, 0
    %p56 = por %p54, %p55
    %p57 = scmp.ne.s32.totalorder %s49, %s51
    %p58 = scmp.eq.s32.totalorder %s20, 1
    %p59 = por %p57, %p58
    %p60 = scmp.ne.s32.totalorder %s51, %s52
    %p61 = scmp.eq.s32.totalorder %s20, 0
    %p62 = por %p60, %p61
    %p63 = scmp.ne.s32.totalorder %s51, %s52
    %p64 = scmp.eq.s32.totalorder %s21, 1
    %p65 = por %p63, %p64
    %p67 = scmp.ne.s32.totalorder %s52, %s66
    %p68 = scmp.eq.s32.totalorder %s21, 0
    %p69 = por %p67, %p68
    %s71 = sadd.s32 %s70, 1
    %p74 = scmp.eq.s32.totalorder %s15, 1
    %p75 = scmp.ne.s32.totalorder %s70, %s72
    %p76 = scmp.eq.s32.totalorder %s15, 0
    %p77 = por %p75, %p76
    %p78 = scmp.ne.s32.totalorder %s70, %s72
    %p79 = scmp.eq.s32.totalorder %s20, 1
    %p80 = por %p78, %p79
    %p81 = scmp.ne.s32.totalorder %s72, %s73
    %p82 = scmp.eq.s32.totalorder %s20, 0
    %p83 = por %p81, %p82
    %p84 = scmp.ne.s32.totalorder %s72, %s73
    %p85 = scmp.eq.s32.totalorder %s21, 1
    %p86 = por %p84, %p85
    %p88 = scmp.ne.s32.totalorder %s73, %s87
    %p89 = scmp.eq.s32.totalorder %s21, 0
    %p90 = por %p88, %p89
    %s92 = sadd.s32 %s91, 1
    %p95 = scmp.eq.s32.totalorder %s15, 1
    %p96 = scmp.ne.s32.totalorder %s91, %s93
    %p97 = scmp.eq.s32.totalorder %s15, 0
    %p98 = por %p96, %p97
    %p99 = scmp.ne.s32.totalorder %s91, %s93
    %p100 = scmp.eq.s32.totalorder %s20, 1
    %p101 = por %p99, %p100
    %p102 = scmp.ne.s32.totalorder %s93, %s94
    %p103 = scmp.eq.s32.totalorder %s20, 0
    %p104 = por %p102, %p103
    %p105 = scmp.ne.s32.totalorder %s93, %s94
    %p106 = scmp.eq.s32.totalorder %s21, 1
    %p107 = por %p105, %p106
    %p109 = scmp.ne.s32.totalorder %s94, %s108
    %p110 = scmp.eq.s32.totalorder %s21, 0
    %p111 = por %p109, %p110
    %s113 = sadd.s32 %s112, 1
    %p116 = scmp.eq.s32.totalorder %s15, 1
    %p117 = scmp.ne.s32.totalorder %s112, %s114
    %p118 = scmp.eq.s32.totalorder %s15, 0
    %p119 = por %p117, %p118
    %p120 = scmp.ne.s32.totalorder %s112, %s114
    %p121 = scmp.eq.s32.totalorder %s20, 1
    %p122 = por %p120, %p121
    %p123 = scmp.ne.s32.totalorder %s114, %s115
    %p124 = scmp.eq.s32.totalorder %s20, 0
    %p125 = por %p123, %p124
    %p126 = scmp.ne.s32.totalorder %s114, %s115
    %p127 = scmp.eq.s32.totalorder %s21, 1
    %p128 = por %p126, %p127
    %p130 = scmp.ne.s32.totalorder %s115, %s129
    %p131 = scmp.eq.s32.totalorder %s21, 0
    %p132 = por %p130, %p131
    %s134 = sadd.s32 %s133, 1
    %p137 = scmp.eq.s32.totalorder %s15, 1
    %p138 = scmp.ne.s32.totalorder %s133, %s135
    %p139 = scmp.eq.s32.totalorder %s15, 0
    %p140 = por %p138, %p139
    %p141 = scmp.ne.s32.totalorder %s133, %s135
    %p142 = scmp.eq.s32.totalorder %s20, 1
    %p143 = por %p141, %p142
    %p144 = scmp.ne.s32.totalorder %s135, %s136
    %p145 = scmp.eq.s32.totalorder %s20, 0
    %p146 = por %p144, %p145
    %p147 = scmp.ne.s32.totalorder %s135, %s136
    %p148 = scmp.eq.s32.totalorder %s21, 1
    %p149 = por %p147, %p148
    %p151 = scmp.ne.s32.totalorder %s136, %s150
    %p152 = scmp.eq.s32.totalorder %s21, 0
    %p153 = por %p151, %p152
    %s155 = sadd.s32 %s154, 1
    %p158 = scmp.eq.s32.totalorder %s15, 1
    %p159 = scmp.ne.s32.totalorder %s154, %s156
    %p160 = scmp.eq.s32.totalorder %s15, 0
    %p161 = por %p159, %p160
    %p162 = scmp.ne.s32.totalorder %s154, %s156
    %p163 = scmp.eq.s32.totalorder %s20, 1
    %p164 = por %p162, %p163
    %p165 = scmp.ne.s32.totalorder %s156, %s157
    %p166 = scmp.eq.s32.totalorder %s20, 0
    %p167 = por %p165, %p166
    %p168 = scmp.ne.s32.totalorder %s156, %s157
    %p169 = scmp.eq.s32.totalorder %s21, 1
    %p170 = por %p168, %p169
    %p172 = scmp.ne.s32.totalorder %s157, %s171
    %p173 = scmp.eq.s32.totalorder %s21, 0
    %p174 = por %p172, %p173
    %s176 = sadd.s32 %s175, 1
    %p179 = scmp.eq.s32.totalorder %s15, 1
    %p180 = scmp.ne.s32.totalorder %s175, %s177
    %p181 = scmp.eq.s32.totalorder %s15, 0
    %p182 = por %p180, %p181
    %p183 = scmp.ne.s32.totalorder %s175, %s177
    %p184 = scmp.eq.s32.totalorder %s20, 1
    %p185 = por %p183, %p184
    %p186 = scmp.ne.s32.totalorder %s177, %s178
    %p187 = scmp.eq.s32.totalorder %s20, 0
    %p188 = por %p186, %p187
    %p189 = scmp.ne.s32.totalorder %s177, %s178
    %p190 = scmp.eq.s32.totalorder %s21, 1
    %p191 = por %p189, %p190
    %p193 = scmp.ne.s32.totalorder %s178, %s192
    %p194 = scmp.eq.s32.totalorder %s21, 0
    %p195 = por %p193, %p194
    %s197 = sadd.s32 %s196, 1
    %p200 = scmp.eq.s32.totalorder %s15, 1
    %p201 = scmp.ne.s32.totalorder %s196, %s198
    %p202 = scmp.eq.s32.totalorder %s15, 0
    %p203 = por %p201, %p202
    %p204 = scmp.ne.s32.totalorder %s196, %s198
    %p205 = scmp.eq.s32.totalorder %s20, 1
    %p206 = por %p204, %p205
    %p207 = scmp.ne.s32.totalorder %s198, %s199
    %p208 = scmp.eq.s32.totalorder %s20, 0
    %p209 = por %p207, %p208
    %p210 = scmp.ne.s32.totalorder %s198, %s199
    %p211 = scmp.eq.s32.totalorder %s21, 1
    %p212 = por %p210, %p211
    %p214 = scmp.ne.s32.totalorder %s199, %s213
    %p215 = scmp.eq.s32.totalorder %s21, 0
    %p216 = por %p214, %p215
    %s217 = ssub.s32 %s15, %s22
    %p218 = scmp.eq.s32.totalorder %s217, 0
    %s220 = sadd.s32 %s219, 1
    %s221 = scalar_select %p218, %s219, %s220
    %p224 = pneg %p218
    %p225 = scmp.eq.s32.totalorder %s15, 1
    %p226 = por %p224, %p225
    %p227 = scmp.ne.s32.totalorder %s219, %s222
    %p228 = scmp.eq.s32.totalorder %s15, 0
    %p229 = por %p227, %p228
    %p230 = scmp.ne.s32.totalorder %s219, %s222
    %p231 = scmp.eq.s32.totalorder %s20, 1
    %p232 = por %p230, %p231
    %p233 = scmp.ne.s32.totalorder %s222, %s223
    %p234 = scmp.eq.s32.totalorder %s20, 0
    %p235 = por %p233, %p234
    %p236 = scmp.ne.s32.totalorder %s222, %s223
    %p237 = scmp.eq.s32.totalorder %s21, 1
    %p238 = por %p236, %p237
    %p240 = scmp.ne.s32.totalorder %s223, %s239
    %p241 = scmp.eq.s32.totalorder %s21, 0
    %p242 = por %p240, %p241
    %p243 = scmp.le.s32.totalorder 1, %s15
    %p244 = scmp.lt.s32.totalorder %s15, 3
    %p245 = pnand %p243, %p244
    %p246 = pneg %p245
    // Predicated region
    $region9: #{vector_module_forward.1} parent=5 // pred_check
      _
    $region10: #{vector_module_forward.1} parent=5 // pred_check_branch
      %248 = sbr.rel (%p245) target = $region12
    $region11: #{vector_module_forward.1} parent=5 // pred_region
      %s249 = ssub.s32 %s15, 1
      // Predicated region
      $region13: #{vector_module_forward.1} parent=11 // pred_check
        %p250 = pneg %p62
      $region14: #{vector_module_forward.1} parent=11 // pred_check_branch
        %252 = sbr.rel (%p250) target = $region16
      $region15: #{vector_module_forward.1} parent=11 // pred_region
        _
      $region16: #{vector_module_forward.1} parent=11 // pred_fallthru
        _
      // Predicated region
      $region17: #{vector_module_forward.1} parent=11 // pred_check
        %p253 = pneg %p83
      $region18: #{vector_module_forward.1} parent=11 // pred_check_branch
        %255 = sbr.rel (%p253) target = $region20
      $region19: #{vector_module_forward.1} parent=11 // pred_region
        _
      $region20: #{vector_module_forward.1} parent=11 // pred_fallthru
        _
      // Predicated region
      $region21: #{vector_module_forward.1} parent=11 // pred_check
        %p256 = pneg %p104
      $region22: #{vector_module_forward.1} parent=11 // pred_check_branch
        %258 = sbr.rel (%p256) target = $region24
      $region23: #{vector_module_forward.1} parent=11 // pred_region
        _
      $region24: #{vector_module_forward.1} parent=11 // pred_fallthru
        _
      // Predicated region
      $region25: #{vector_module_forward.1} parent=11 // pred_check
        %p259 = pneg %p125
      $region26: #{vector_module_forward.1} parent=11 // pred_check_branch
        %261 = sbr.rel (%p259) target = $region28
      $region27: #{vector_module_forward.1} parent=11 // pred_region
        _
      $region28: #{vector_module_forward.1} parent=11 // pred_fallthru
        _
      // Predicated region
      $region29: #{vector_module_forward.1} parent=11 // pred_check
        %p262 = pneg %p146
      $region30: #{vector_module_forward.1} parent=11 // pred_check_branch
        %264 = sbr.rel (%p262) target = $region32
      $region31: #{vector_module_forward.1} parent=11 // pred_region
        _
      $region32: #{vector_module_forward.1} parent=11 // pred_fallthru
        _
      // Predicated region
      $region33: #{vector_module_forward.1} parent=11 // pred_check
        %p265 = pneg %p167
      $region34: #{vector_module_forward.1} parent=11 // pred_check_branch
        %267 = sbr.rel (%p265) target = $region36
      $region35: #{vector_module_forward.1} parent=11 // pred_region
        _
      $region36: #{vector_module_forward.1} parent=11 // pred_fallthru
        _
      // Predicated region
      $region37: #{vector_module_forward.1} parent=11 // pred_check
        %p268 = pneg %p188
      $region38: #{vector_module_forward.1} parent=11 // pred_check_branch
        %270 = sbr.rel (%p268) target = $region40
      $region39: #{vector_module_forward.1} parent=11 // pred_region
        _
      $region40: #{vector_module_forward.1} parent=11 // pred_fallthru
        _
      // Predicated region
      $region41: #{vector_module_forward.1} parent=11 // pred_check
        %p271 = pneg %p209
      $region42: #{vector_module_forward.1} parent=11 // pred_check_branch
        %273 = sbr.rel (%p271) target = $region44
      $region43: #{vector_module_forward.1} parent=11 // pred_region
        _
      $region44: #{vector_module_forward.1} parent=11 // pred_fallthru
        _
    $region12: #{vector_module_forward.1} parent=5 // pred_fallthru
      _
    %p274 = scmp.lt.s32.totalorder %s15, 2
    // Predicated region
    $region45: #{vector_module_forward.1} parent=5 // pred_check
      %p275 = pneg %p274
    $region46: #{vector_module_forward.1} parent=5 // pred_check_branch
      %277 = sbr.rel (%p275) target = $region48
    $region47: #{vector_module_forward.1} parent=5 // pred_region
      // Predicated region
      $region49: #{vector_module_forward.1} parent=47 // pred_check
        %p278 = pneg %p35
      $region50: #{vector_module_forward.1} parent=47 // pred_check_branch
        %280 = sbr.rel (%p278) target = $region52
      $region51: #{vector_module_forward.1} parent=47 // pred_region
        %s281 = smul.u32 13, %s15
        %p282 = scmp.lt.s32.totalorder %s281, 25
        %s283 = scalar_select %p282, %s281, 25
        %s284 = smul.addr %s283, 4
        %s285 = scalar_lea.vmem %s0, %s284
        %s286 = smul.u32 13, %s15
      $region52: #{vector_module_forward.1} parent=47 // pred_fallthru
        _
    $region48: #{vector_module_forward.1} parent=5 // pred_fallthru
      _
    %p287 = scmp.le.s32.totalorder 1, %s15
    %p288 = scmp.lt.s32.totalorder %s15, 3
    %p289 = pnand %p287, %p288
    %p290 = pneg %p289
    // Predicated region
    $region53: #{vector_module_forward.1} parent=5 // pred_check
      _
    $region54: #{vector_module_forward.1} parent=5 // pred_check_branch
      %292 = sbr.rel (%p289) target = $region56
    $region55: #{vector_module_forward.1} parent=5 // pred_region
      %s293 = ssub.s32 %s15, 1
      %s294 = smul.u32 13, %s20
      %p295 = scmp.lt.s32.totalorder %s294, 25
      %s296 = scalar_select %p295, %s294, 25
      %s297 = smul.addr %s296, 4
      %s298 = scalar_lea.vmem %s0, %s297
      %p299 = pneg %p41
      %p300 = pneg %p38
      %p301 = pneg %p62
      %p302 = pneg %p59
      %p303 = pneg %p83
      %p304 = pneg %p80
      %p305 = pneg %p104
      %p306 = pneg %p101
      %p307 = pneg %p125
      %p308 = pneg %p122
      %p309 = pneg %p146
      %p310 = pneg %p143
      %p311 = pneg %p167
      %p312 = pneg %p164
      %p313 = pneg %p188
      %p314 = pneg %p185
      %p315 = pneg %p209
      %p316 = pneg %p206
      %p317 = pneg %p235
      %p318 = pneg %p232
      %s319 = smul.u32 13, %s20
      %p320 = scmp.lt.s32.totalorder %s319, 25
      %s321 = scalar_select %p320, %s319, 25
      %s322 = smul.addr %s321, 8
      %s323 = scalar_lea.vmem %s9, %s322
      %s324 = smul.u32 13, %s20
      %p325 = scmp.lt.s32.totalorder %s324, 25
      %s326 = scalar_select %p325, %s324, 25
      %s327 = smul.addr %s326, 4
      %s328 = scalar_lea.vmem %s0, %s327
      %s329 = smul.u32 13, %s20
      %s330 = smul.u32 13, %s20
      %p331 = scmp.lt.s32.totalorder %s330, 25
      %s332 = scalar_select %p331, %s330, 25
      %s333 = smul.addr %s332, 8
      %s334 = scalar_lea.vmem %s9, %s333
      %s335 = smul.u32 13, %s20
      %v337 = vld [vmem:[%s328] sm:$0xf]
      %v338 = vld [vmem:[%s328 + $0x4] sm:$0xf]
      %v339 = vld [vmem:[%s328 + $0x8] sm:$0xf]
      %v340 = vld [vmem:[%s328 + $0xc] sm:$0xf]
      %v341 = vld [vmem:[%s328 + $0x10] sm:$0xf]
      %v342 = vld [vmem:[%s328 + $0x14] sm:$0xf]
      %v343 = vld [vmem:[%s328 + $0x18] sm:$0xf]
      %v344 = vld [vmem:[%s328 + $0x1c] sm:$0xf]
      %v345 = vld [vmem:[%s328 + $0x20] sm:$0xf]
      %v346 = vld [vmem:[%s328 + $0x24] sm:$0xf]
      %v347 = vld [vmem:[%s328 + $0x28] sm:$0xf]
      %v348 = vld [vmem:[%s328 + $0x2c] sm:$0xf]
      %v349 = vld [vmem:[%s328 + $0x30] sm:$0xf]
      %v350 = vld [vmem:[%s1] sm:$0xf]
      %v351 = vld [vmem:[%s1 + $0x4] sm:$0xf]
      %v352 = vld [vmem:[%s2] sm:$0x1]
      %v354 = vlaneseq
      %v355 = vshrl.u32 %v354, 7
      %v356 = vsub.s32 0, %v355
      %v357 = vrot.slane %v352, %v356
      %v372 = vunpack.c.l.b16 %v337
      %v373 = vunpack.c.l.b16 %v338
      %v374 = vunpack.c.l.b16 %v339
      %v375 = vunpack.c.l.b16 %v340
      %v376 = vunpack.c.l.b16 %v341
      %v377 = vunpack.c.l.b16 %v342
      %v378 = vunpack.c.l.b16 %v343
      %v379 = vunpack.c.l.b16 %v344
      %v380 = vunpack.c.l.b16 %v345
      %v381 = vunpack.c.l.b16 %v346
      %v382 = vunpack.c.l.b16 %v347
      %v383 = vunpack.c.l.b16 %v348
      %v384 = vunpack.c.l.b16 %v349
      %v385 = vpack.c.b16 %v373, %v372
      %v386 = vpack.c.b16 %v375, %v374
      %v387 = vpack.c.b16 %v377, %v376
      %v388 = vpack.c.b16 %v379, %v378
      %v389 = vpack.c.b16 %v381, %v380
      %v390 = vpack.c.b16 %v383, %v382
      %v391 = vpack.c.b16 %v384, %v384
      %v394 = vunpack.c.l.b16 %v350
      %v395 = vunpack.c.l.b16 %v351
      %v396 = vpack.c.b16 %v395, %v394
      %vm398 = vcmask 130048
      %v400 = vsel %vm398, %v385, 0
      %v403 = vsel %vm398, %v386, 0
      %v406 = vsel %vm398, %v387, 0
      %v409 = vsel %vm398, %v388, 0
      %v412 = vsel %vm398, %v389, 0
      %v415 = vsel %vm398, %v390, 0
      %v418 = vsel %vm398, %v391, 0
      %420 = vmatprep.subr.bf16.mxu0 0
      %421 = vmatpush1.bf16.msra.mxu0 0
      %422 = vmatprep.subr.bf16.mxu0 0
      %423 = vmatpush1.bf16.msra.mxu0 0
      %424 = vmatprep.subr.bf16.mxu0 0
      %425 = vmatpush1.bf16.msra.mxu0 0
      %426 = vmatprep.subr.bf16.mxu0 0
      %427 = vmatpush1.bf16.msra.mxu0 0
      %428 = vmatprep.subr.bf16.mxu0 0
      %429 = vmatpush1.bf16.msra.mxu0 0
      %430 = vmatprep.subr.bf16.mxu0 0
      %431 = vmatpush1.bf16.msra.mxu0 0
      %432 = vmatprep.subr.bf16.mxu0 0
      %433 = vmatpush1.bf16.msra.mxu0 0
      %434 = vmatprep.subr.bf16.mxu0 0
      %435 = vmatpush1.bf16.msra.mxu0 %v396
      %436 = vmatprep.subr.bf16.mxu0 0
      %437 = vmatpush2.bf16.msra.mxu0 0
      %438 = vmatprep.subr.bf16.mxu0 0
      %439 = vmatpush2.bf16.msra.mxu0 0
      %440 = vmatprep.subr.bf16.mxu0 0
      %441 = vmatpush2.bf16.msra.mxu0 0
      %442 = vmatprep.subr.bf16.mxu0 0
      %443 = vmatpush2.bf16.msra.mxu0 0
      %444 = vmatprep.subr.bf16.mxu0 0
      %445 = vmatpush2.bf16.msra.mxu0 0
      %446 = vmatprep.subr.bf16.mxu0 0
      %447 = vmatpush2.bf16.msra.mxu0 0
      %448 = vmatprep.subr.bf16.mxu0 0
      %449 = vmatpush2.bf16.msra.mxu0 0
      %450 = vmatprep.subr.bf16.mxu0 0
      %451 = vmatpush2.bf16.msra.mxu0 0
      %452 = vmatprep.mubr.bf16.mxu0 0
      %453 = vmatmul.mubr.bf16.gmra.mxu0 %v400
      %v454 = vpop.f32.mrf.mxu0
      %v455 = vadd.f32 %v357, %v454
      %v456 = vpop.f32.mrf.mxu0
      %v457 = vpop.f32.mrf.mxu0
      %v458 = vadd.f32 %v357, %v457
      %v459 = vpop.f32.mrf.mxu0
      %460 = vmatprep.mubr.bf16.mxu0 0
      %461 = vmatmul.mubr.bf16.gmra.mxu0 %v403
      %v462 = vpop.f32.mrf.mxu0
      %v463 = vadd.f32 %v357, %v462
      %v464 = vpop.f32.mrf.mxu0
      %v465 = vpop.f32.mrf.mxu0
      %v466 = vadd.f32 %v357, %v465
      %v467 = vpop.f32.mrf.mxu0
      %468 = vmatprep.mubr.bf16.mxu0 0
      %469 = vmatmul.mubr.bf16.gmra.mxu0 %v406
      %v470 = vpop.f32.mrf.mxu0
      %v471 = vadd.f32 %v357, %v470
      %v472 = vpop.f32.mrf.mxu0
      %v473 = vpop.f32.mrf.mxu0
      %v474 = vadd.f32 %v357, %v473
      %v475 = vpop.f32.mrf.mxu0
      %476 = vmatprep.mubr.bf16.mxu0 0
      %477 = vmatmul.mubr.bf16.gmra.mxu0 %v409
      %v478 = vpop.f32.mrf.mxu0
      %v479 = vadd.f32 %v357, %v478
      %v480 = vpop.f32.mrf.mxu0
      %v481 = vpop.f32.mrf.mxu0
      %v482 = vadd.f32 %v357, %v481
      %v483 = vpop.f32.mrf.mxu0
      %484 = vmatprep.mubr.bf16.mxu0 0
      %485 = vmatmul.mubr.bf16.gmra.mxu0 %v412
      %v486 = vpop.f32.mrf.mxu0
      %v487 = vadd.f32 %v357, %v486
      %v488 = vpop.f32.mrf.mxu0
      %v489 = vpop.f32.mrf.mxu0
      %v490 = vadd.f32 %v357, %v489
      %v491 = vpop.f32.mrf.mxu0
      %492 = vmatprep.mubr.bf16.mxu0 0
      %493 = vmatmul.mubr.bf16.gmra.mxu0 %v415
      %v494 = vpop.f32.mrf.mxu0
      %v495 = vadd.f32 %v357, %v494
      %v496 = vpop.f32.mrf.mxu0
      %v497 = vpop.f32.mrf.mxu0
      %v498 = vadd.f32 %v357, %v497
      %v499 = vpop.f32.mrf.mxu0
      %500 = vmatprep.mubr.bf16.mxu0 0
      %501 = vmatmul.mubr.bf16.gmra.mxu0 %v418
      %v502 = vpop.f32.mrf.mxu0
      %v503 = vadd.f32 %v357, %v502
      %v504 = vpop.f32.mrf.mxu0
      %v505 = vpop.f32.mrf.mxu0
      %v506 = vpop.f32.mrf.mxu0
      %507 = vdwg.mxu0
      %v508 = vmax.f32 %v455, 0.0
      %v509 = vmax.f32 %v458, 0.0
      %v510 = vmax.f32 %v463, 0.0
      %v511 = vmax.f32 %v466, 0.0
      %v512 = vmax.f32 %v471, 0.0
      %v513 = vmax.f32 %v474, 0.0
      %v514 = vmax.f32 %v479, 0.0
      %v515 = vmax.f32 %v482, 0.0
      %v516 = vmax.f32 %v487, 0.0
      %v517 = vmax.f32 %v490, 0.0
      %v518 = vmax.f32 %v495, 0.0
      %v519 = vmax.f32 %v498, 0.0
      %v520 = vmax.f32 %v503, 0.0
      %v521 = vpack.c.bf16 %v509, %v508
      %v522 = vpack.c.bf16 %v511, %v510
      %v523 = vpack.c.bf16 %v513, %v512
      %v524 = vpack.c.bf16 %v515, %v514
      %v525 = vpack.c.bf16 %v517, %v516
      %v526 = vpack.c.bf16 %v519, %v518
      %v527 = vpack.c.bf16 %v520, %v520
      %v528 = vld [vmem:[%s3] sm:$0xf]
      %v529 = vld [vmem:[%s3 + $0x4] sm:$0xf]
      %v530 = vld [vmem:[%s3 + $0x8] sm:$0xf]
      %v531 = vld [vmem:[%s3 + $0xc] sm:$0xf]
      %v532 = vld [vmem:[%s3 + $0x10] sm:$0xf]
      %v533 = vld [vmem:[%s3 + $0x14] sm:$0xf]
      %v534 = vld [vmem:[%s3 + $0x18] sm:$0xf]
      %v535 = vld [vmem:[%s3 + $0x1c] sm:$0xf]
      %v536 = vld [vmem:[%s3 + $0x20] sm:$0xf]
      %v537 = vld [vmem:[%s3 + $0x24] sm:$0xf]
      %v538 = vld [vmem:[%s3 + $0x28] sm:$0xf]
      %v539 = vld [vmem:[%s3 + $0x2c] sm:$0xf]
      %v540 = vld [vmem:[%s3 + $0x30] sm:$0xf]
      %v541 = vld [vmem:[%s3 + $0x34] sm:$0xf]
      %v542 = vld [vmem:[%s3 + $0x38] sm:$0xf]
      %v543 = vld [vmem:[%s3 + $0x3c] sm:$0xf]
      %v544 = vld [vmem:[%s4] sm:$0x1]
      %v546 = vlaneseq
      %v547 = vshrl.u32 %v546, 7
      %v548 = vsub.s32 0, %v547
      %v549 = vrot.slane %v544, %v548
      %v567 = vunpack.c.l.b16 %v528
      %v568 = vunpack.c.l.b16 %v529
      %v569 = vunpack.c.l.b16 %v530
      %v570 = vunpack.c.l.b16 %v531
      %v571 = vunpack.c.l.b16 %v532
      %v572 = vunpack.c.l.b16 %v533
      %v573 = vunpack.c.l.b16 %v534
      %v574 = vunpack.c.l.b16 %v535
      %v575 = vunpack.c.l.b16 %v536
      %v576 = vunpack.c.l.b16 %v537
      %v577 = vunpack.c.l.b16 %v538
      %v578 = vunpack.c.l.b16 %v539
      %v579 = vunpack.c.l.b16 %v540
      %v580 = vunpack.c.l.b16 %v541
      %v581 = vunpack.c.l.b16 %v542
      %v582 = vunpack.c.l.b16 %v543
      %v583 = vpack.c.b16 %v568, %v567
      %v584 = vpack.c.b16 %v570, %v569
      %v585 = vpack.c.b16 %v572, %v571
      %v586 = vpack.c.b16 %v574, %v573
      %v587 = vpack.c.b16 %v576, %v575
      %v588 = vpack.c.b16 %v578, %v577
      %v589 = vpack.c.b16 %v580, %v579
      %v590 = vpack.c.b16 %v582, %v581
      %599 = vmatprep.subr.bf16.mxu0 0
      %600 = vmatpush1.bf16.msra.mxu0 %v590
      %601 = vmatprep.subr.bf16.mxu0 0
      %602 = vmatpush1.bf16.msra.mxu0 %v589
      %603 = vmatprep.subr.bf16.mxu0 0
      %604 = vmatpush1.bf16.msra.mxu0 %v588
      %605 = vmatprep.subr.bf16.mxu0 0
      %606 = vmatpush1.bf16.msra.mxu0 %v587
      %607 = vmatprep.subr.bf16.mxu0 0
      %608 = vmatpush1.bf16.msra.mxu0 %v586
      %609 = vmatprep.subr.bf16.mxu0 0
      %610 = vmatpush1.bf16.msra.mxu0 %v585
      %611 = vmatprep.subr.bf16.mxu0 0
      %612 = vmatpush1.bf16.msra.mxu0 %v584
      %613 = vmatprep.subr.bf16.mxu0 0
      %614 = vmatpush1.bf16.msra.mxu0 %v583
      %615 = vmatprep.subr.bf16.mxu0 0
      %616 = vmatpush2.bf16.msra.mxu0 0
      %617 = vmatprep.subr.bf16.mxu0 0
      %618 = vmatpush2.bf16.msra.mxu0 0
      %619 = vmatprep.subr.bf16.mxu0 0
      %620 = vmatpush2.bf16.msra.mxu0 0
      %621 = vmatprep.subr.bf16.mxu0 0
      %622 = vmatpush2.bf16.msra.mxu0 0
      %623 = vmatprep.subr.bf16.mxu0 0
      %624 = vmatpush2.bf16.msra.mxu0 0
      %625 = vmatprep.subr.bf16.mxu0 0
      %626 = vmatpush2.bf16.msra.mxu0 0
      %627 = vmatprep.subr.bf16.mxu0 0
      %628 = vmatpush2.bf16.msra.mxu0 0
      %629 = vmatprep.subr.bf16.mxu0 0
      %630 = vmatpush2.bf16.msra.mxu0 0
      %631 = vmatprep.mubr.bf16.mxu0 0
      %632 = vmatmul.mubr.bf16.gmra.mxu0 %v521
      %v633 = vpop.f32.mrf.mxu0
      %v634 = vadd.f32 %v549, %v633
      %v635 = vpop.f32.mrf.mxu0
      %v636 = vpop.f32.mrf.mxu0
      %v637 = vadd.f32 %v549, %v636
      %v638 = vpop.f32.mrf.mxu0
      %639 = vmatprep.mubr.bf16.mxu0 0
      %640 = vmatmul.mubr.bf16.gmra.mxu0 %v522
      %v641 = vpop.f32.mrf.mxu0
      %v642 = vadd.f32 %v549, %v641
      %v643 = vpop.f32.mrf.mxu0
      %v644 = vpop.f32.mrf.mxu0
      %v645 = vadd.f32 %v549, %v644
      %v646 = vpop.f32.mrf.mxu0
      %647 = vmatprep.mubr.bf16.mxu0 0
      %648 = vmatmul.mubr.bf16.gmra.mxu0 %v523
      %v649 = vpop.f32.mrf.mxu0
      %v650 = vadd.f32 %v549, %v649
      %v651 = vpop.f32.mrf.mxu0
      %v652 = vpop.f32.mrf.mxu0
      %v653 = vadd.f32 %v549, %v652
      %v654 = vpop.f32.mrf.mxu0
      %655 = vmatprep.mubr.bf16.mxu0 0
      %656 = vmatmul.mubr.bf16.gmra.mxu0 %v524
      %v657 = vpop.f32.mrf.mxu0
      %v658 = vadd.f32 %v549, %v657
      %v659 = vpop.f32.mrf.mxu0
      %v660 = vpop.f32.mrf.mxu0
      %v661 = vadd.f32 %v549, %v660
      %v662 = vpop.f32.mrf.mxu0
      %663 = vmatprep.mubr.bf16.mxu0 0
      %664 = vmatmul.mubr.bf16.gmra.mxu0 %v525
      %v665 = vpop.f32.mrf.mxu0
      %v666 = vadd.f32 %v549, %v665
      %v667 = vpop.f32.mrf.mxu0
      %v668 = vpop.f32.mrf.mxu0
      %v669 = vadd.f32 %v549, %v668
      %v670 = vpop.f32.mrf.mxu0
      %671 = vmatprep.mubr.bf16.mxu0 0
      %672 = vmatmul.mubr.bf16.gmra.mxu0 %v526
      %v673 = vpop.f32.mrf.mxu0
      %v674 = vadd.f32 %v549, %v673
      %v675 = vpop.f32.mrf.mxu0
      %v676 = vpop.f32.mrf.mxu0
      %v677 = vadd.f32 %v549, %v676
      %v678 = vpop.f32.mrf.mxu0
      %679 = vmatprep.mubr.bf16.mxu0 0
      %680 = vmatmul.mubr.bf16.gmra.mxu0 %v527
      %v681 = vpop.f32.mrf.mxu0
      %v682 = vadd.f32 %v549, %v681
      %v683 = vpop.f32.mrf.mxu0
      %v684 = vpop.f32.mrf.mxu0
      %v685 = vpop.f32.mrf.mxu0
      %686 = vdwg.mxu0
      %v687 = vmax.f32 %v634, 0.0
      %v688 = vmax.f32 %v637, 0.0
      %v689 = vmax.f32 %v642, 0.0
      %v690 = vmax.f32 %v645, 0.0
      %v691 = vmax.f32 %v650, 0.0
      %v692 = vmax.f32 %v653, 0.0
      %v693 = vmax.f32 %v658, 0.0
      %v694 = vmax.f32 %v661, 0.0
      %v695 = vmax.f32 %v666, 0.0
      %v696 = vmax.f32 %v669, 0.0
      %v697 = vmax.f32 %v674, 0.0
      %v698 = vmax.f32 %v677, 0.0
      %v699 = vmax.f32 %v682, 0.0
      %v700 = vpack.c.bf16 %v688, %v687
      %v701 = vpack.c.bf16 %v690, %v689
      %v702 = vpack.c.bf16 %v692, %v691
      %v703 = vpack.c.bf16 %v694, %v693
      %v704 = vpack.c.bf16 %v696, %v695
      %v705 = vpack.c.bf16 %v698, %v697
      %v706 = vpack.c.bf16 %v699, %v699
      %v707 = vld [vmem:[%s5] sm:$0xf]
      %v708 = vld [vmem:[%s5 + $0x4] sm:$0xf]
      %v709 = vld [vmem:[%s5 + $0x8] sm:$0xf]
      %v710 = vld [vmem:[%s5 + $0xc] sm:$0xf]
      %v711 = vld [vmem:[%s5 + $0x10] sm:$0xf]
      %v712 = vld [vmem:[%s5 + $0x14] sm:$0xf]
      %v713 = vld [vmem:[%s5 + $0x18] sm:$0xf]
      %v714 = vld [vmem:[%s5 + $0x1c] sm:$0xf]
      %v715 = vld [vmem:[%s5 + $0x20] sm:$0xf]
      %v716 = vld [vmem:[%s5 + $0x24] sm:$0xf]
      %v717 = vld [vmem:[%s5 + $0x28] sm:$0xf]
      %v718 = vld [vmem:[%s5 + $0x2c] sm:$0xf]
      %v719 = vld [vmem:[%s5 + $0x30] sm:$0xf]
      %v720 = vld [vmem:[%s5 + $0x34] sm:$0xf]
      %v721 = vld [vmem:[%s5 + $0x38] sm:$0xf]
      %v722 = vld [vmem:[%s5 + $0x3c] sm:$0xf]
      %v723 = vld [vmem:[%s6] sm:$0x1]
      %v725 = vlaneseq
      %v726 = vshrl.u32 %v725, 7
      %v727 = vsub.s32 0, %v726
      %v728 = vrot.slane %v723, %v727
      %v746 = vunpack.c.l.b16 %v707
      %v747 = vunpack.c.l.b16 %v708
      %v748 = vunpack.c.l.b16 %v709
      %v749 = vunpack.c.l.b16 %v710
      %v750 = vunpack.c.l.b16 %v711
      %v751 = vunpack.c.l.b16 %v712
      %v752 = vunpack.c.l.b16 %v713
      %v753 = vunpack.c.l.b16 %v714
      %v754 = vunpack.c.l.b16 %v715
      %v755 = vunpack.c.l.b16 %v716
      %v756 = vunpack.c.l.b16 %v717
      %v757 = vunpack.c.l.b16 %v718
      %v758 = vunpack.c.l.b16 %v719
      %v759 = vunpack.c.l.b16 %v720
      %v760 = vunpack.c.l.b16 %v721
      %v761 = vunpack.c.l.b16 %v722
      %v762 = vpack.c.b16 %v747, %v746
      %v763 = vpack.c.b16 %v749, %v748
      %v764 = vpack.c.b16 %v751, %v750
      %v765 = vpack.c.b16 %v753, %v752
      %v766 = vpack.c.b16 %v755, %v754
      %v767 = vpack.c.b16 %v757, %v756
      %v768 = vpack.c.b16 %v759, %v758
      %v769 = vpack.c.b16 %v761, %v760
      %778 = vmatprep.subr.bf16.mxu0 0
      %779 = vmatpush1.bf16.msra.mxu0 %v769
      %780 = vmatprep.subr.bf16.mxu0 0
      %781 = vmatpush1.bf16.msra.mxu0 %v768
      %782 = vmatprep.subr.bf16.mxu0 0
      %783 = vmatpush1.bf16.msra.mxu0 %v767
      %784 = vmatprep.subr.bf16.mxu0 0
      %785 = vmatpush1.bf16.msra.mxu0 %v766
      %786 = vmatprep.subr.bf16.mxu0 0
      %787 = vmatpush1.bf16.msra.mxu0 %v765
      %788 = vmatprep.subr.bf16.mxu0 0
      %789 = vmatpush1.bf16.msra.mxu0 %v764
      %790 = vmatprep.subr.bf16.mxu0 0
      %791 = vmatpush1.bf16.msra.mxu0 %v763
      %792 = vmatprep.subr.bf16.mxu0 0
      %793 = vmatpush1.bf16.msra.mxu0 %v762
      %794 = vmatprep.subr.bf16.mxu0 0
      %795 = vmatpush2.bf16.msra.mxu0 0
      %796 = vmatprep.subr.bf16.mxu0 0
      %797 = vmatpush2.bf16.msra.mxu0 0
      %798 = vmatprep.subr.bf16.mxu0 0
      %799 = vmatpush2.bf16.msra.mxu0 0
      %800 = vmatprep.subr.bf16.mxu0 0
      %801 = vmatpush2.bf16.msra.mxu0 0
      %802 = vmatprep.subr.bf16.mxu0 0
      %803 = vmatpush2.bf16.msra.mxu0 0
      %804 = vmatprep.subr.bf16.mxu0 0
      %805 = vmatpush2.bf16.msra.mxu0 0
      %806 = vmatprep.subr.bf16.mxu0 0
      %807 = vmatpush2.bf16.msra.mxu0 0
      %808 = vmatprep.subr.bf16.mxu0 0
      %809 = vmatpush2.bf16.msra.mxu0 0
      %810 = vmatprep.mubr.bf16.mxu0 0
      %811 = vmatmul.mubr.bf16.gmra.mxu0 %v700
      %v812 = vpop.f32.mrf.mxu0
      %v813 = vadd.f32 %v728, %v812
      %v814 = vpop.f32.mrf.mxu0
      %v815 = vpop.f32.mrf.mxu0
      %v816 = vadd.f32 %v728, %v815
      %v817 = vpop.f32.mrf.mxu0
      %818 = vmatprep.mubr.bf16.mxu0 0
      %819 = vmatmul.mubr.bf16.gmra.mxu0 %v701
      %v820 = vpop.f32.mrf.mxu0
      %v821 = vadd.f32 %v728, %v820
      %v822 = vpop.f32.mrf.mxu0
      %v823 = vpop.f32.mrf.mxu0
      %v824 = vadd.f32 %v728, %v823
      %v825 = vpop.f32.mrf.mxu0
      %826 = vmatprep.mubr.bf16.mxu0 0
      %827 = vmatmul.mubr.bf16.gmra.mxu0 %v702
      %v828 = vpop.f32.mrf.mxu0
      %v829 = vadd.f32 %v728, %v828
      %v830 = vpop.f32.mrf.mxu0
      %v831 = vpop.f32.mrf.mxu0
      %v832 = vadd.f32 %v728, %v831
      %v833 = vpop.f32.mrf.mxu0
      %834 = vmatprep.mubr.bf16.mxu0 0
      %835 = vmatmul.mubr.bf16.gmra.mxu0 %v703
      %v836 = vpop.f32.mrf.mxu0
      %v837 = vadd.f32 %v728, %v836
      %v838 = vpop.f32.mrf.mxu0
      %v839 = vpop.f32.mrf.mxu0
      %v840 = vadd.f32 %v728, %v839
      %v841 = vpop.f32.mrf.mxu0
      %842 = vmatprep.mubr.bf16.mxu0 0
      %843 = vmatmul.mubr.bf16.gmra.mxu0 %v704
      %v844 = vpop.f32.mrf.mxu0
      %v845 = vadd.f32 %v728, %v844
      %v846 = vpop.f32.mrf.mxu0
      %v847 = vpop.f32.mrf.mxu0
      %v848 = vadd.f32 %v728, %v847
      %v849 = vpop.f32.mrf.mxu0
      %850 = vmatprep.mubr.bf16.mxu0 0
      %851 = vmatmul.mubr.bf16.gmra.mxu0 %v705
      %v852 = vpop.f32.mrf.mxu0
      %v853 = vadd.f32 %v728, %v852
      %v854 = vpop.f32.mrf.mxu0
      %v855 = vpop.f32.mrf.mxu0
      %v856 = vadd.f32 %v728, %v855
      %v857 = vpop.f32.mrf.mxu0
      %858 = vmatprep.mubr.bf16.mxu0 0
      %859 = vmatmul.mubr.bf16.gmra.mxu0 %v706
      %v860 = vpop.f32.mrf.mxu0
      %v861 = vadd.f32 %v728, %v860
      %v862 = vpop.f32.mrf.mxu0
      %v863 = vpop.f32.mrf.mxu0
      %v864 = vpop.f32.mrf.mxu0
      %865 = vdwg.mxu0
      %v866 = vmax.f32 %v813, 0.0
      %v867 = vmax.f32 %v816, 0.0
      %v868 = vmax.f32 %v821, 0.0
      %v869 = vmax.f32 %v824, 0.0
      %v870 = vmax.f32 %v829, 0.0
      %v871 = vmax.f32 %v832, 0.0
      %v872 = vmax.f32 %v837, 0.0
      %v873 = vmax.f32 %v840, 0.0
      %v874 = vmax.f32 %v845, 0.0
      %v875 = vmax.f32 %v848, 0.0
      %v876 = vmax.f32 %v853, 0.0
      %v877 = vmax.f32 %v856, 0.0
      %v878 = vmax.f32 %v861, 0.0
      %v879 = vpack.c.bf16 %v867, %v866
      %v880 = vpack.c.bf16 %v869, %v868
      %v881 = vpack.c.bf16 %v871, %v870
      %v882 = vpack.c.bf16 %v873, %v872
      %v883 = vpack.c.bf16 %v875, %v874
      %v884 = vpack.c.bf16 %v877, %v876
      %v885 = vpack.c.bf16 %v878, %v878
      %v886 = vld [vmem:[%s7] sm:$0xf]
      %v887 = vld [vmem:[%s7 + $0x4] sm:$0xf]
      %v888 = vld [vmem:[%s7 + $0x8] sm:$0xf]
      %v889 = vld [vmem:[%s7 + $0xc] sm:$0xf]
      %v890 = vld [vmem:[%s7 + $0x10] sm:$0xf]
      %v891 = vld [vmem:[%s7 + $0x14] sm:$0xf]
      %v892 = vld [vmem:[%s7 + $0x18] sm:$0xf]
      %v893 = vld [vmem:[%s7 + $0x1c] sm:$0xf]
      %v894 = vld [vmem:[%s7 + $0x20] sm:$0xf]
      %v895 = vld [vmem:[%s7 + $0x24] sm:$0xf]
      %v896 = vld [vmem:[%s7 + $0x28] sm:$0xf]
      %v897 = vld [vmem:[%s7 + $0x2c] sm:$0xf]
      %v898 = vld [vmem:[%s7 + $0x30] sm:$0xf]
      %v899 = vld [vmem:[%s7 + $0x34] sm:$0xf]
      %v900 = vld [vmem:[%s7 + $0x38] sm:$0xf]
      %v901 = vld [vmem:[%s7 + $0x3c] sm:$0xf]
      %v902 = vld [vmem:[%s8] sm:$0x1]
      %v904 = vlaneseq
      %v905 = vshrl.u32 %v904, 7
      %v906 = vsub.s32 0, %v905
      %v907 = vrot.slane %v902, %v906
      %v925 = vunpack.c.l.b16 %v886
      %v926 = vunpack.c.l.b16 %v887
      %v927 = vunpack.c.l.b16 %v888
      %v928 = vunpack.c.l.b16 %v889
      %v929 = vunpack.c.l.b16 %v890
      %v930 = vunpack.c.l.b16 %v891
      %v931 = vunpack.c.l.b16 %v892
      %v932 = vunpack.c.l.b16 %v893
      %v933 = vunpack.c.l.b16 %v894
      %v934 = vunpack.c.l.b16 %v895
      %v935 = vunpack.c.l.b16 %v896
      %v936 = vunpack.c.l.b16 %v897
      %v937 = vunpack.c.l.b16 %v898
      %v938 = vunpack.c.l.b16 %v899
      %v939 = vunpack.c.l.b16 %v900
      %v940 = vunpack.c.l.b16 %v901
      %v941 = vpack.c.b16 %v926, %v925
      %v942 = vpack.c.b16 %v928, %v927
      %v943 = vpack.c.b16 %v930, %v929
      %v944 = vpack.c.b16 %v932, %v931
      %v945 = vpack.c.b16 %v934, %v933
      %v946 = vpack.c.b16 %v936, %v935
      %v947 = vpack.c.b16 %v938, %v937
      %v948 = vpack.c.b16 %v940, %v939
      %957 = vmatprep.subr.bf16.mxu0 0
      %958 = vmatpush1.bf16.msra.mxu0 %v948
      %959 = vmatprep.subr.bf16.mxu0 0
      %960 = vmatpush1.bf16.msra.mxu0 %v947
      %961 = vmatprep.subr.bf16.mxu0 0
      %962 = vmatpush1.bf16.msra.mxu0 %v946
      %963 = vmatprep.subr.bf16.mxu0 0
      %964 = vmatpush1.bf16.msra.mxu0 %v945
      %965 = vmatprep.subr.bf16.mxu0 0
      %966 = vmatpush1.bf16.msra.mxu0 %v944
      %967 = vmatprep.subr.bf16.mxu0 0
      %968 = vmatpush1.bf16.msra.mxu0 %v943
      %969 = vmatprep.subr.bf16.mxu0 0
      %970 = vmatpush1.bf16.msra.mxu0 %v942
      %971 = vmatprep.subr.bf16.mxu0 0
      %972 = vmatpush1.bf16.msra.mxu0 %v941
      %973 = vmatprep.subr.bf16.mxu0 0
      %974 = vmatpush2.bf16.msra.mxu0 0
      %975 = vmatprep.subr.bf16.mxu0 0
      %976 = vmatpush2.bf16.msra.mxu0 0
      %977 = vmatprep.subr.bf16.mxu0 0
      %978 = vmatpush2.bf16.msra.mxu0 0
      %979 = vmatprep.subr.bf16.mxu0 0
      %980 = vmatpush2.bf16.msra.mxu0 0
      %981 = vmatprep.subr.bf16.mxu0 0
      %982 = vmatpush2.bf16.msra.mxu0 0
      %983 = vmatprep.subr.bf16.mxu0 0
      %984 = vmatpush2.bf16.msra.mxu0 0
      %985 = vmatprep.subr.bf16.mxu0 0
      %986 = vmatpush2.bf16.msra.mxu0 0
      %987 = vmatprep.subr.bf16.mxu0 0
      %988 = vmatpush2.bf16.msra.mxu0 0
      %989 = vmatprep.mubr.bf16.mxu0 0
      %990 = vmatmul.mubr.bf16.gmra.mxu0 %v879
      %v991 = vpop.f32.mrf.mxu0
      %v992 = vadd.f32 %v907, %v991
      %v993 = vpop.f32.mrf.mxu0
      %v994 = vpop.f32.mrf.mxu0
      %v995 = vadd.f32 %v907, %v994
      %v996 = vpop.f32.mrf.mxu0
      %997 = vmatprep.mubr.bf16.mxu0 0
      %998 = vmatmul.mubr.bf16.gmra.mxu0 %v880
      %v999 = vpop.f32.mrf.mxu0
      %v1000 = vadd.f32 %v907, %v999
      %v1001 = vpop.f32.mrf.mxu0
      %v1002 = vpop.f32.mrf.mxu0
      %v1003 = vadd.f32 %v907, %v1002
      %v1004 = vpop.f32.mrf.mxu0
      %1005 = vmatprep.mubr.bf16.mxu0 0
      %1006 = vmatmul.mubr.bf16.gmra.mxu0 %v881
      %v1007 = vpop.f32.mrf.mxu0
      %v1008 = vadd.f32 %v907, %v1007
      %v1009 = vpop.f32.mrf.mxu0
      %v1010 = vpop.f32.mrf.mxu0
      %v1011 = vadd.f32 %v907, %v1010
      %v1012 = vpop.f32.mrf.mxu0
      %1013 = vmatprep.mubr.bf16.mxu0 0
      %1014 = vmatmul.mubr.bf16.gmra.mxu0 %v882
      %v1015 = vpop.f32.mrf.mxu0
      %v1016 = vadd.f32 %v907, %v1015
      %v1017 = vpop.f32.mrf.mxu0
      %v1018 = vpop.f32.mrf.mxu0
      %v1019 = vadd.f32 %v907, %v1018
      %v1020 = vpop.f32.mrf.mxu0
      %1021 = vmatprep.mubr.bf16.mxu0 0
      %1022 = vmatmul.mubr.bf16.gmra.mxu0 %v883
      %v1023 = vpop.f32.mrf.mxu0
      %v1024 = vadd.f32 %v907, %v1023
      %v1025 = vpop.f32.mrf.mxu0
      %v1026 = vpop.f32.mrf.mxu0
      %v1027 = vadd.f32 %v907, %v1026
      %v1028 = vpop.f32.mrf.mxu0
      %1029 = vmatprep.mubr.bf16.mxu0 0
      %1030 = vmatmul.mubr.bf16.gmra.mxu0 %v884
      %v1031 = vpop.f32.mrf.mxu0
      %v1032 = vadd.f32 %v907, %v1031
      %v1033 = vpop.f32.mrf.mxu0
      %v1034 = vpop.f32.mrf.mxu0
      %v1035 = vadd.f32 %v907, %v1034
      %v1036 = vpop.f32.mrf.mxu0
      %1037 = vmatprep.mubr.bf16.mxu0 0
      %1038 = vmatmul.mubr.bf16.gmra.mxu0 %v885
      %v1039 = vpop.f32.mrf.mxu0
      %v1040 = vadd.f32 %v907, %v1039
      %v1041 = vpop.f32.mrf.mxu0
      %v1042 = vpop.f32.mrf.mxu0
      %v1043 = vpop.f32.mrf.mxu0
      %1044 = vdwg.mxu0
      %vm1045 = vcmask 64512
      %1046 = vst.msk [vmem:[%s334] sm:$0xff] %vm1045, %v992
      %1047 = vst.msk [vmem:[%s334 + $0x8] sm:$0xff] %vm1045, %v995
      %1048 = vst.msk [vmem:[%s334 + $0x10] sm:$0xff] %vm1045, %v1000
      %1049 = vst.msk [vmem:[%s334 + $0x18] sm:$0xff] %vm1045, %v1003
      %1050 = vst.msk [vmem:[%s334 + $0x20] sm:$0xff] %vm1045, %v1008
      %1051 = vst.msk [vmem:[%s334 + $0x28] sm:$0xff] %vm1045, %v1011
      %1052 = vst.msk [vmem:[%s334 + $0x30] sm:$0xff] %vm1045, %v1016
      %1053 = vst.msk [vmem:[%s334 + $0x38] sm:$0xff] %vm1045, %v1019
      %1054 = vst.msk [vmem:[%s334 + $0x40] sm:$0xff] %vm1045, %v1024
      %1055 = vst.msk [vmem:[%s334 + $0x48] sm:$0xff] %vm1045, %v1027
      %1056 = vst.msk [vmem:[%s334 + $0x50] sm:$0xff] %vm1045, %v1032
      %1057 = vst.msk [vmem:[%s334 + $0x58] sm:$0xff] %vm1045, %v1035
      %1058 = vst.msk [vmem:[%s334 + $0x60] sm:$0xff] %vm1045, %v1040
      %s1059 = smul.u32 13, %s20
      %p1060 = scmp.lt.s32.totalorder %s1059, 25
      %s1061 = scalar_select %p1060, %s1059, 25
      %s1062 = smul.addr %s1061, 8
      %s1063 = scalar_lea.vmem %s9, %s1062
      // Predicated region
      $region57: #{vector_module_forward.1} parent=55 // pred_check
        %p1064 = pneg %p232
      $region58: #{vector_module_forward.1} parent=55 // pred_check_branch
        %1066 = sbr.rel (%p1064) target = $region60
      $region59: #{vector_module_forward.1} parent=55 // pred_region
        %s1067 = smul.u32 13, %s20
      $region60: #{vector_module_forward.1} parent=55 // pred_fallthru
        _
    $region56: #{vector_module_forward.1} parent=5 // pred_fallthru
      _
    %p1068 = scmp.le.s32.totalorder 2, %s15
    // Predicated region
    $region61: #{vector_module_forward.1} parent=5 // pred_check
      %p1069 = pneg %p1068
    $region62: #{vector_module_forward.1} parent=5 // pred_check_branch
      %1071 = sbr.rel (%p1069) target = $region64
    $region63: #{vector_module_forward.1} parent=5 // pred_region
      %s1072 = ssub.s32 %s15, 2
      // Predicated region
      $region65: #{vector_module_forward.1} parent=63 // pred_check
        %p1073 = pneg %p238
      $region66: #{vector_module_forward.1} parent=63 // pred_check_branch
        %1075 = sbr.rel (%p1073) target = $region68
      $region67: #{vector_module_forward.1} parent=63 // pred_region
        %s1076 = smul.u32 13, %s21
        %p1077 = scmp.lt.s32.totalorder %s1076, 25
        %s1078 = scalar_select %p1077, %s1076, 25
        %s1079 = smul.addr %s1078, 8
        %s1080 = scalar_lea.vmem %s9, %s1079
      $region68: #{vector_module_forward.1} parent=63 // pred_fallthru
        _
    $region64: #{vector_module_forward.1} parent=5 // pred_fallthru
      _
  $region6: #{vector_module_forward.1} parent=0 // loop_footer
    %s19 = sadd.s32 1, %s15
  $region7: #{vector_module_forward.1} parent=0 // loop_footer_branch
    %14 = sbr.rel target = $region3
  $region8: #{vector_module_forward.1} parent=0 // loop_exit
    _

</llo_original>
